<compile_context>
chip_gen: v5e
topology: v5e:2x2
jax: 0.10.0
libtpu: 0.0.40
codegen_flags: <defaults>
</compile_context>

<pallas_src>
import functools

import jax
import jax.numpy as jnp
from jax import lax
from jax.experimental import pallas as pl
from jax.experimental.pallas import tpu as pltpu


_REDUCE_FNS = {"min": jnp.min, "max": jnp.max, "mean": jnp.mean}
_LANE = 128


def _round_up(x, m):
    return ((x + m - 1) // m) * m


# --------------------------------- kernel ---------------------------------

def _double_critic_kernel(obs_ref, act_ref, w1o_ref, w1a_ref, b1_ref,
                          w2_ref, b2_ref, w3_ref, b3_ref, o_ref, *, reduce_fn):
    """Fused double-critic MLP on one (TILE_B, .) batch tile.

    Layers 1/2 run in row form (batch on sublanes); both critics are evaluated at
    once via stacked / block-diagonal weights.  Layer 3 is computed as W3 @ h^T so
    the result (and the store) is lane-dense (batch on the 128-lane axis).
    """
    # Layer 1 -- the obs/action concat is fused as two partial matmuls.
    h = jnp.dot(obs_ref[...], w1o_ref[...], preferred_element_type=jnp.float32)
    h = h + jnp.dot(act_ref[...], w1a_ref[...], preferred_element_type=jnp.float32)
    h = jnp.maximum(h + b1_ref[...], 0.0)                       # ReLU
    # Layer 2 -- block-diagonal weights keep the two critics independent.
    h = jnp.dot(h, w2_ref[...], preferred_element_type=jnp.float32)
    h = jnp.maximum(h + b2_ref[...], 0.0)                       # ReLU
    # Layer 3 -- q[c, b] = sum_k W3[c, k] * h[b, k]  (A @ B^T, natively MXU-supported)
    q = lax.dot_general(w3_ref[...], h,
                        dimension_numbers=(((1,), (1,)), ((), ())),
                        preferred_element_type=jnp.float32)      # (C, TILE_B)
    q = q + b3_ref[...]                                          # (C, 1) broadcast
    if reduce_fn is not None:
        q = reduce_fn(q, axis=0, keepdims=True)                  # (1, TILE_B)
    o_ref[...] = q.astype(o_ref.dtype)


# ------------------------- tile / VMEM planning ---------------------------

def _generation_plan():
    """(tile_b cap, vmem_limit cap) per TPU generation, conservative defaults."""
    kind = ""
    try:
        kind = jax.devices()[0].device_kind.lower()
    except Exception:
        pass
    if ("v5 lite" in kind) or ("v5e" in kind) or ("v5lite" in kind):
        # slower HBM -> ~4k already near roofline; scoped default is only 16 MiB.
        return 4096, 48 << 20
    if "v7" in kind:
        # only 64 MiB physical VMEM per TensorCore.
        return 8192, 56 << 20
    # v6e / default (128 MiB physical VMEM).
    return 8192, 64 << 20


def _choose_tile_b(batch, cap):
    if batch <= 256:
        return batch                       # single full-array block
    # >=2 grid steps so both v7x TensorCores get work; never exceed the VMEM cap.
    return int(min(cap, _round_up(pl.cdiv(batch, 2), _LANE)))


def _per_row_vmem_bytes(obs_dim, act_dim, ch1, ch2, in_itemsize):
    """Lane-padded VMEM bytes consumed per batch row of a tile."""
    pad = lambda d: _round_up(max(int(d), 1), _LANE)
    inputs = 2 * (pad(obs_dim) + pad(act_dim)) * in_itemsize     # double-buffered
    acts = (pad(ch1) + pad(ch2)) * 4                             # f32 activations
    out = 2 * 8 * 4                                              # (<=8, tile_b) x 2 bufs
    return inputs + acts + out


# --------------------------------- wrapper ---------------------------------

def double_critic_forward(obs, action, fused_params, *, reduce=True,
                          reduce_mode="min", tile_b=None):
    """Q(s, a) of a DoubleCritic.  reduce=True -> (B, 1) aggregated with `reduce_mode`;
    reduce=False -> (critic_num, B, 1) raw per-critic outputs."""
    if action is None:
        # TODO(synk): V(s) path (action=None) needs params packed with act_dim=0 and a
        # kernel variant without the action input; not exercised by this instantiation.
        raise NotImplementedError("action=None (V(s)) path is not implemented")

    w1o, w1a, b1, w2, b2, w3r, b3 = fused_params
    B, obs_dim = obs.shape
    act_dim = action.shape[1]
    assert w1o.shape[0] == obs_dim and w1a.shape[0] == act_dim
    critic_num = b3.shape[0]
    out_rows = 1 if reduce else critic_num
    reduce_fn = _REDUCE_FNS[reduce_mode] if reduce else None

    cap, vmem_cap = _generation_plan()
    if tile_b is None:
        tile_b = _choose_tile_b(B, cap)
    else:
        tile_b = min(int(tile_b), B)
        if tile_b < B:                       # grid > 1: output lane dim must be 128-aligned
            tile_b = max(_LANE, (tile_b // _LANE) * _LANE)
    num_steps = pl.cdiv(B, tile_b)           # ragged final block handled by Pallas
    grid = (num_steps,)

    ch1 = w1o.shape[1]          # critic_num * hidden1
    ch2 = w2.shape[1]           # critic_num * hidden2
    in_itemsize = jnp.dtype(obs.dtype).itemsize
    vmem_limit = int(min(
        vmem_cap,
        max(32 << 20,
            tile_b * _per_row_vmem_bytes(obs_dim, act_dim, ch1, ch2, in_itemsize)
            + (16 << 20))))

    def resident(arr):  # whole-array block, constant index -> stays in VMEM
        return pl.BlockSpec(arr.shape, lambda i: (0, 0))

    kernel = functools.partial(_double_critic_kernel, reduce_fn=reduce_fn)

    weight_bytes = sum(int(p.size) * jnp.dtype(p.dtype).itemsize for p in fused_params)
    cost = pl.CostEstimate(
        flops=2 * B * ((obs_dim + act_dim) * ch1 + ch1 * ch2 + ch2 * critic_num),
        transcendentals=0,
        bytes_accessed=B * (obs_dim + act_dim) * in_itemsize
        + B * out_rows * 4 + weight_bytes,
    )

    q = pl.pallas_call(
        kernel,
        grid=grid,
        out_shape=jax.ShapeDtypeStruct((out_rows, B), jnp.float32),
        in_specs=[
            pl.BlockSpec((tile_b, obs_dim), lambda i: (i, 0)),
            pl.BlockSpec((tile_b, act_dim), lambda i: (i, 0)),
            resident(w1o), resident(w1a), resident(b1),
            resident(w2), resident(b2), resident(w3r), resident(b3),
        ],
        out_specs=pl.BlockSpec((out_rows, tile_b), lambda i: (0, i)),
        compiler_params=pltpu.CompilerParams(
            dimension_semantics=("parallel",),
            vmem_limit_bytes=vmem_limit),
        cost_estimate=cost,
    )(obs, action, w1o, w1a, b1, w2, b2, w3r, b3)

    if reduce:
        return q.reshape(B, 1)               # matches torch.min(output, dim=0)[0]
    return q.reshape(critic_num, B, 1)       # raw (critic_num, B, output_dim)


# ----------------------------- parameter handling -----------------------------

def init_double_critic_params(key, input_dim, hidden_dims, output_dim=1, critic_num=2):
    """Per-critic params, torch.nn.Linear default init U(-1/sqrt(fan_in), 1/sqrt(fan_in)),
    weights stored as [in_features, out_features]."""
    assert output_dim == 1, "fused kernel packing assumes output_dim == 1 per critic"
    dims = [input_dim] + list(hidden_dims) + [output_dim]
    critics = []
    for _ in range(critic_num):
        layers = []
        for fan_in, fan_out in zip(dims[:-1], dims[1:]):
            key, kw, kb = jax.random.split(key, 3)
            bound = 1.0 / (fan_in ** 0.5)
            w = jax.random.uniform(kw, (fan_in, fan_out), jnp.float32, -bound, bound)
            b = jax.random.uniform(kb, (fan_out,), jnp.float32, -bound, bound)
            layers.append((w, b))
        critics.append(layers)
    return critics


def pack_double_critic_params(critics, obs_dim, act_dim):
    """Pack per-critic [(W1,b1),(W2,b2),(W3,b3)] into one fused parameter set
    (column-stacked layer 1, block-diagonal layer 2, row-stacked layer 3)."""
    del act_dim  # implied by W1 shape
    C = len(critics)
    h1 = critics[0][0][0].shape[1]
    h2 = critics[0][1][0].shape[1]
    w1o = jnp.concatenate([c[0][0][:obs_dim] for c in critics], axis=1)   # (obs, C*h1)
    w1a = jnp.concatenate([c[0][0][obs_dim:] for c in critics], axis=1)   # (act, C*h1)
    b1 = jnp.concatenate([c[0][1] for c in critics], axis=0).reshape(1, C * h1)
    w2 = jnp.zeros((C * h1, C * h2), jnp.float32)
    for i, c in enumerate(critics):
        w2 = w2.at[i * h1:(i + 1) * h1, i * h2:(i + 1) * h2].set(c[1][0])
    b2 = jnp.concatenate([c[1][1] for c in critics], axis=0).reshape(1, C * h2)
    w3r = jnp.zeros((C, C * h2), jnp.float32)
    for i, c in enumerate(critics):
        w3r = w3r.at[i, i * h2:(i + 1) * h2].set(c[2][0][:, 0])
    b3 = jnp.stack([c[2][1] for c in critics]).reshape(C, 1)
    return (w1o, w1a, b1, w2, b2, w3r, b3)


def _reference_double_critic(obs, action, critics):
    """Pure-JAX reference: per-critic MLPs on cat([obs, action]); returns (C, B, 1)."""
    x = jnp.concatenate([obs, action], axis=-1)
    outs = []
    for (w1, b1), (w2, b2), (w3, b3) in critics:
        h = jnp.maximum(x @ w1 + b1, 0.0)
        h = jnp.maximum(h @ w2 + b2, 0.0)
        outs.append(h @ w3 + b3)
    return jnp.stack(outs)


if __name__ == "__main__":
    key = jax.random.PRNGKey(0)

    obs_dim = 24
    act_dim = 8
    hidden_dims = [32, 32]
    critic_num = 2

    key, k_p = jax.random.split(key)
    critics = init_double_critic_params(
        k_p, obs_dim + act_dim, hidden_dims, output_dim=1, critic_num=critic_num)
    fused = pack_double_critic_params(critics, obs_dim, act_dim)

    # ---- small batch (single full-array block) ----
    batch = 2
    key, k_obs, k_act = jax.random.split(key, 3)
    obs = jax.random.normal(k_obs, (batch, obs_dim), jnp.float32)
    action = jax.random.normal(k_act, (batch, act_dim), jnp.float32)

    q_min = double_critic_forward(obs, action, fused, reduce=True, reduce_mode="min")
    q_all = double_critic_forward(obs, action, fused, reduce=False)
    q_min = jax.block_until_ready(q_min)
    q_all = jax.block_until_ready(q_all)

    ref_all = _reference_double_critic(obs, action, critics)   # (C, B, 1)
    ref_min = jnp.min(ref_all, axis=0)                         # (B, 1)

    assert q_min.shape == (batch, 1)
    assert q_all.shape == (critic_num, batch, 1)
    assert jnp.allclose(q_min, ref_min, atol=1e-5, rtol=1e-5)
    assert jnp.allclose(q_all, ref_all, atol=1e-5, rtol=1e-5)

    # ---- non-aligned batch (multi-step grid + ragged final block, no wrapper pad) ----
    batch2 = 300
    key, k_obs2, k_act2 = jax.random.split(key, 3)
    obs2 = jax.random.normal(k_obs2, (batch2, obs_dim), jnp.float32)
    act2 = jax.random.normal(k_act2, (batch2, act_dim), jnp.float32)

    q2_min = jax.block_until_ready(
        double_critic_forward(obs2, act2, fused, reduce=True, reduce_mode="min"))
    q2_all = jax.block_until_ready(
        double_critic_forward(obs2, act2, fused, reduce=False))

    ref2_all = _reference_double_critic(obs2, act2, critics)
    ref2_min = jnp.min(ref2_all, axis=0)

    assert q2_min.shape == (batch2, 1)
    assert q2_all.shape == (critic_num, batch2, 1)
    assert jnp.allclose(q2_min, ref2_min, atol=1e-5, rtol=1e-5)
    assert jnp.allclose(q2_all, ref2_all, atol=1e-5, rtol=1e-5)

    print("KERNEL_OK")
</pallas_src>

<mosaic_0001>
module attributes {stable_mosaic.version = 11 : i64} {
  func.func @_double_critic_kernel(%arg0: i32, %arg1: memref<2x24xf32, #tpu.memory_space<vmem>>, %arg2: memref<2x8xf32, #tpu.memory_space<vmem>>, %arg3: memref<24x64xf32, #tpu.memory_space<vmem>>, %arg4: memref<8x64xf32, #tpu.memory_space<vmem>>, %arg5: memref<1x64xf32, #tpu.memory_space<vmem>>, %arg6: memref<64x64xf32, #tpu.memory_space<vmem>>, %arg7: memref<1x64xf32, #tpu.memory_space<vmem>>, %arg8: memref<2x64xf32, #tpu.memory_space<vmem>>, %arg9: memref<2x1xf32, #tpu.memory_space<vmem>>, %arg10: memref<1x2xf32, #tpu.memory_space<vmem>>) attributes {dimension_semantics = [#tpu.dimension_semantics<parallel>], iteration_bounds = array<i64: 1>, scalar_prefetch = 0 : i64, scratch_operands = 0 : i64, tpu.core_type = #tpu.core_type<tc>, window_params = [{transform_indices = @transform_0, window_bounds = array<i64: 2, 24>}, {transform_indices = @transform_1, window_bounds = array<i64: 2, 8>}, {pipeline_mode = #tpu.pipeline_mode<synchronous>, transform_indices = @transform_2, window_bounds = array<i64: 24, 64>}, {pipeline_mode = #tpu.pipeline_mode<synchronous>, transform_indices = @transform_3, window_bounds = array<i64: 8, 64>}, {pipeline_mode = #tpu.pipeline_mode<synchronous>, transform_indices = @transform_4, window_bounds = array<i64: 1, 64>}, {pipeline_mode = #tpu.pipeline_mode<synchronous>, transform_indices = @transform_5, window_bounds = array<i64: 64, 64>}, {pipeline_mode = #tpu.pipeline_mode<synchronous>, transform_indices = @transform_6, window_bounds = array<i64: 1, 64>}, {pipeline_mode = #tpu.pipeline_mode<synchronous>, transform_indices = @transform_7, window_bounds = array<i64: 2, 64>}, {pipeline_mode = #tpu.pipeline_mode<synchronous>, transform_indices = @transform_8, window_bounds = array<i64: 2, 1>}, {transform_indices = @transform_9, window_bounds = array<i64: 1, 2>}]} {
    %c0 = arith.constant 0 : index
    %c0_0 = arith.constant 0 : index
    %0 = vector.load %arg1[%c0, %c0_0] : memref<2x24xf32, #tpu.memory_space<vmem>>, vector<2x24xf32>
    %c0_1 = arith.constant 0 : index
    %c0_2 = arith.constant 0 : index
    %1 = vector.load %arg3[%c0_1, %c0_2] : memref<24x64xf32, #tpu.memory_space<vmem>>, vector<24x64xf32>
    %cst = arith.constant dense<0.000000e+00> : vector<2x64xf32>
    %2 = tpu.matmul %0, %1, %cst {dimension_numbers = #tpu.dot_dimension_numbers<[1], [0], [0], [1], [0, 0, 1, 1], [], []>} : vector<2x24xf32>, vector<24x64xf32>, vector<2x64xf32> -> vector<2x64xf32>
    %c0_3 = arith.constant 0 : index
    %c0_4 = arith.constant 0 : index
    %3 = vector.load %arg2[%c0_3, %c0_4] : memref<2x8xf32, #tpu.memory_space<vmem>>, vector<2x8xf32>
    %c0_5 = arith.constant 0 : index
    %c0_6 = arith.constant 0 : index
    %4 = vector.load %arg4[%c0_5, %c0_6] : memref<8x64xf32, #tpu.memory_space<vmem>>, vector<8x64xf32>
    %cst_7 = arith.constant dense<0.000000e+00> : vector<2x64xf32>
    %5 = tpu.matmul %3, %4, %cst_7 {dimension_numbers = #tpu.dot_dimension_numbers<[1], [0], [0], [1], [0, 0, 1, 1], [], []>} : vector<2x8xf32>, vector<8x64xf32>, vector<2x64xf32> -> vector<2x64xf32>
    %6 = arith.addf %2, %5 : vector<2x64xf32>
    %c0_8 = arith.constant 0 : index
    %c0_9 = arith.constant 0 : index
    %7 = vector.load %arg5[%c0_8, %c0_9] : memref<1x64xf32, #tpu.memory_space<vmem>>, vector<1x64xf32>
    %8 = vector.broadcast %7 : vector<1x64xf32> to vector<2x64xf32>
    %9 = arith.addf %6, %8 : vector<2x64xf32>
    %cst_10 = arith.constant 0.000000e+00 : f32
    %10 = vector.broadcast %cst_10 : f32 to vector<2x64xf32>
    %11 = arith.maximumf %9, %10 : vector<2x64xf32>
    %c0_11 = arith.constant 0 : index
    %c0_12 = arith.constant 0 : index
    %12 = vector.load %arg6[%c0_11, %c0_12] : memref<64x64xf32, #tpu.memory_space<vmem>>, vector<64x64xf32>
    %cst_13 = arith.constant dense<0.000000e+00> : vector<2x64xf32>
    %13 = tpu.matmul %11, %12, %cst_13 {dimension_numbers = #tpu.dot_dimension_numbers<[1], [0], [0], [1], [0, 0, 1, 1], [], []>} : vector<2x64xf32>, vector<64x64xf32>, vector<2x64xf32> -> vector<2x64xf32>
    %c0_14 = arith.constant 0 : index
    %c0_15 = arith.constant 0 : index
    %14 = vector.load %arg7[%c0_14, %c0_15] : memref<1x64xf32, #tpu.memory_space<vmem>>, vector<1x64xf32>
    %15 = vector.broadcast %14 : vector<1x64xf32> to vector<2x64xf32>
    %16 = arith.addf %13, %15 : vector<2x64xf32>
    %cst_16 = arith.constant 0.000000e+00 : f32
    %17 = vector.broadcast %cst_16 : f32 to vector<2x64xf32>
    %18 = arith.maximumf %16, %17 : vector<2x64xf32>
    %c0_17 = arith.constant 0 : index
    %c0_18 = arith.constant 0 : index
    %19 = vector.load %arg8[%c0_17, %c0_18] : memref<2x64xf32, #tpu.memory_space<vmem>>, vector<2x64xf32>
    %cst_19 = arith.constant dense<0.000000e+00> : vector<2x2xf32>
    %20 = tpu.matmul %19, %18, %cst_19 {dimension_numbers = #tpu.dot_dimension_numbers<[1], [1], [0], [0], [0, 0, 1, 0], [], []>} : vector<2x64xf32>, vector<2x64xf32>, vector<2x2xf32> -> vector<2x2xf32>
    %c0_20 = arith.constant 0 : index
    %c0_21 = arith.constant 0 : index
    %21 = vector.load %arg9[%c0_20, %c0_21] : memref<2x1xf32, #tpu.memory_space<vmem>>, vector<2x1xf32>
    %22 = vector.broadcast %21 : vector<2x1xf32> to vector<2x2xf32>
    %23 = arith.addf %20, %22 : vector<2x2xf32>
    %cst_22 = arith.constant dense<0x7F800000> : vector<2xf32>
    %24 = vector.multi_reduction <minimumf>, %23, %cst_22 [0] : vector<2x2xf32> to vector<2xf32>
    %25 = vector.shape_cast %24 : vector<2xf32> to vector<1x2xf32>
    %c0_23 = arith.constant 0 : index
    %c0_24 = arith.constant 0 : index
    %26 = vector.load %arg10[%c0_23, %c0_24] : memref<1x2xf32, #tpu.memory_space<vmem>>, vector<1x2xf32>
    tpu.vector_store %arg10[%c0_23, %c0_24], %25 {strides = array<i32>} : memref<1x2xf32, #tpu.memory_space<vmem>>, vector<1x2xf32>,
    return
  }
  func.func @transform_0(%arg0: i32) -> (i32, i32) {
    %c0_i32 = arith.constant 0 : i32
    %c0_i32_0 = arith.constant 0 : i32
    return %arg0, %c0_i32 : i32, i32
  }
  func.func @transform_1(%arg0: i32) -> (i32, i32) {
    %c0_i32 = arith.constant 0 : i32
    %c0_i32_0 = arith.constant 0 : i32
    return %arg0, %c0_i32 : i32, i32
  }
  func.func @transform_2(%arg0: i32) -> (i32, i32) {
    %c0_i32 = arith.constant 0 : i32
    %c0_i32_0 = arith.constant 0 : i32
    %c0_i32_1 = arith.constant 0 : i32
    return %c0_i32, %c0_i32_0 : i32, i32
  }
  func.func @transform_3(%arg0: i32) -> (i32, i32) {
    %c0_i32 = arith.constant 0 : i32
    %c0_i32_0 = arith.constant 0 : i32
    %c0_i32_1 = arith.constant 0 : i32
    return %c0_i32, %c0_i32_0 : i32, i32
  }
  func.func @transform_4(%arg0: i32) -> (i32, i32) {
    %c0_i32 = arith.constant 0 : i32
    %c0_i32_0 = arith.constant 0 : i32
    %c0_i32_1 = arith.constant 0 : i32
    return %c0_i32, %c0_i32_0 : i32, i32
  }
  func.func @transform_5(%arg0: i32) -> (i32, i32) {
    %c0_i32 = arith.constant 0 : i32
    %c0_i32_0 = arith.constant 0 : i32
    %c0_i32_1 = arith.constant 0 : i32
    return %c0_i32, %c0_i32_0 : i32, i32
  }
  func.func @transform_6(%arg0: i32) -> (i32, i32) {
    %c0_i32 = arith.constant 0 : i32
    %c0_i32_0 = arith.constant 0 : i32
    %c0_i32_1 = arith.constant 0 : i32
    return %c0_i32, %c0_i32_0 : i32, i32
  }
  func.func @transform_7(%arg0: i32) -> (i32, i32) {
    %c0_i32 = arith.constant 0 : i32
    %c0_i32_0 = arith.constant 0 : i32
    %c0_i32_1 = arith.constant 0 : i32
    return %c0_i32, %c0_i32_0 : i32, i32
  }
  func.func @transform_8(%arg0: i32) -> (i32, i32) {
    %c0_i32 = arith.constant 0 : i32
    %c0_i32_0 = arith.constant 0 : i32
    %c0_i32_1 = arith.constant 0 : i32
    return %c0_i32, %c0_i32_0 : i32, i32
  }
  func.func @transform_9(%arg0: i32) -> (i32, i32) {
    %c0_i32 = arith.constant 0 : i32
    %c0_i32_0 = arith.constant 0 : i32
    return %c0_i32, %arg0 : i32, i32
  }
}

</mosaic_0001>

<llo_original>
// kernel: tpu_custom_call.1
$region0: #{tpu_custom_call.1}
  #allocation0 [shape = 'u32[]', space=smem, size = 0x4, offset = 0x4, fixed_abs, tag = 'smem constant byte address 0x4 - core index']
  #allocation1 [shape = 'u32[72,128]{1,0:T(1,128)}', space=vmem, size = 0x9000, scoped, tag = 'internal scratch']
  %s0 = inlined_call_operand.vmem [shape: f32[2,24], index: 0, kind: input, shape index: {}]
  %s1 = inlined_call_operand.hbm [shape: f32[2,8], index: 1, kind: input, shape index: {}]
  %s2 = inlined_call_operand.hbm [shape: f32[24,64], index: 2, kind: input, shape index: {}]
  %s3 = inlined_call_operand.hbm [shape: f32[8,64], index: 3, kind: input, shape index: {}]
  %s4 = inlined_call_operand.vmem [shape: f32[1,64], index: 4, kind: input, shape index: {}]
  %s5 = inlined_call_operand.hbm [shape: f32[64,64], index: 5, kind: input, shape index: {}]
  %s6 = inlined_call_operand.vmem [shape: f32[1,64], index: 6, kind: input, shape index: {}]
  %s7 = inlined_call_operand.vmem [shape: f32[2,64], index: 7, kind: input, shape index: {}]
  %s8 = inlined_call_operand.vmem [shape: f32[2,1], index: 8, kind: input, shape index: {}]
  %s9 = inlined_call_operand.hbm [shape: f32[1,2], index: 9, kind: output, shape index: {}]
  %s10 = sld [smem:[#allocation0]]
  $region62: #{tpu_custom_call.1} parent=0
    _
  %s12 = ssub.s32 1, %s10
  %s13 = scalar_select 0, %s12, %s10
  $region1: #{tpu_custom_call.1} parent=0
    #allocation2 [shape = 'u8[1024]{0}', space=vmem, size = 0x400, scoped, tag = 'input window, operand 1, single buffered']
    #allocation3 [shape = 's32[1]{0}', space=sflag, size = 0x4, scoped, tag = 'scoped memory for tpu_custom_call.1']
    #allocation4 [shape = 's32[1]{0}', space=sflag, size = 0x4, scoped, tag = 'scoped memory for tpu_custom_call.1']
    #allocation5 [shape = 'u8[12288]{0}', space=vmem, size = 0x3000, scoped, tag = 'input window, operand 2, single buffered']
    #allocation6 [shape = 's32[1]{0}', space=sflag, size = 0x4, scoped, tag = 'scoped memory for tpu_custom_call.1']
    #allocation7 [shape = 'u8[4096]{0}', space=vmem, size = 0x1000, scoped, tag = 'input window, operand 3, single buffered']
    #allocation8 [shape = 'u8[32768]{0}', space=vmem, size = 0x8000, scoped, tag = 'input window, operand 5, single buffered']
    #allocation9 [shape = 's32[1]{0}', space=sflag, size = 0x4, scoped, tag = 'scoped memory for tpu_custom_call.1']
    #allocation10 [shape = 'u8[512]{0}', space=vmem, size = 0x400, scoped, tag = 'output window, operand 0, single buffered']
    %14 = vsyncpa [#allocation3], 0
    %15 = vsyncpa [#allocation6], 0
    %16 = vsyncpa [#allocation9], 0
    %17 = vsyncpa [#allocation4], 0
    // Predicated region
    $region2: #{tpu_custom_call.1} parent=1 // pred_check
      _
    $region3: #{tpu_custom_call.1} parent=1 // pred_check_branch
      %19 = sbr.rel (0) target = $region5
    $region4: #{tpu_custom_call.1} parent=1 // pred_region
      _
    $region5: #{tpu_custom_call.1} parent=1 // pred_fallthru
      _
    // Predicated region
    $region6: #{tpu_custom_call.1} parent=1 // pred_check
      _
    $region7: #{tpu_custom_call.1} parent=1 // pred_check_branch
      %21 = sbr.rel (0) target = $region9
    $region8: #{tpu_custom_call.1} parent=1 // pred_region
      %23 = vsyncadd [#allocation3], 0
      %s25 = sshll.u32 %s1, 4
      %s26 = int_to_ptr.hbm [resolvable:$true] %s25
      %s27 = sshll.u32 [#allocation2], 4
      %s28 = int_to_ptr.vmem [resolvable:$true] %s27
      %30 = dma.hbm_to_vmem [thread:$0]  %s26, 32, %s28, [#allocation3]
    $region9: #{tpu_custom_call.1} parent=1 // pred_fallthru
      _
    // Predicated region
    $region10: #{tpu_custom_call.1} parent=1 // pred_check
      _
    $region11: #{tpu_custom_call.1} parent=1 // pred_check_branch
      %32 = sbr.rel (0) target = $region13
    $region12: #{tpu_custom_call.1} parent=1 // pred_region
      %34 = vsyncadd [#allocation6], 0
      %s35 = sshll.u32 %s2, 4
      %s36 = int_to_ptr.hbm [resolvable:$true] %s35
      %s37 = sshll.u32 [#allocation5], 4
      %s38 = int_to_ptr.vmem [resolvable:$true] %s37
      %43 = dma.hbm_to_vmem [thread:$0]  %s36, 384, %s38, [#allocation6], 128, 128, 8
    $region13: #{tpu_custom_call.1} parent=1 // pred_fallthru
      _
    // Predicated region
    $region14: #{tpu_custom_call.1} parent=1 // pred_check
      _
    $region15: #{tpu_custom_call.1} parent=1 // pred_check_branch
      %45 = sbr.rel (0) target = $region17
    $region16: #{tpu_custom_call.1} parent=1 // pred_region
      %47 = vsyncadd [#allocation6], 0
      %s49 = sshll.u32 %s3, 4
      %s50 = int_to_ptr.hbm [resolvable:$true] %s49
      %s51 = sshll.u32 [#allocation7], 4
      %s52 = int_to_ptr.vmem [resolvable:$true] %s51
      %54 = dma.hbm_to_vmem [thread:$0]  %s50, 128, %s52, [#allocation6]
    $region17: #{tpu_custom_call.1} parent=1 // pred_fallthru
      _
    // Predicated region
    $region18: #{tpu_custom_call.1} parent=1 // pred_check
      _
    $region19: #{tpu_custom_call.1} parent=1 // pred_check_branch
      %56 = sbr.rel (0) target = $region21
    $region20: #{tpu_custom_call.1} parent=1 // pred_region
      _
    $region21: #{tpu_custom_call.1} parent=1 // pred_fallthru
      _
    // Predicated region
    $region22: #{tpu_custom_call.1} parent=1 // pred_check
      _
    $region23: #{tpu_custom_call.1} parent=1 // pred_check_branch
      %58 = sbr.rel (0) target = $region25
    $region24: #{tpu_custom_call.1} parent=1 // pred_region
      %60 = vsyncadd [#allocation9], 0
      %s61 = sshll.u32 %s5, 4
      %s62 = int_to_ptr.hbm [resolvable:$true] %s61
      %s63 = sshll.u32 [#allocation8], 4
      %s64 = int_to_ptr.vmem [resolvable:$true] %s63
      %69 = dma.hbm_to_vmem [thread:$0]  %s62, 1024, %s64, [#allocation9], 128, 128, 8
    $region25: #{tpu_custom_call.1} parent=1 // pred_fallthru
      _
    // Predicated region
    $region26: #{tpu_custom_call.1} parent=1 // pred_check
      _
    $region27: #{tpu_custom_call.1} parent=1 // pred_check_branch
      %71 = sbr.rel (0) target = $region29
    $region28: #{tpu_custom_call.1} parent=1 // pred_region
      _
    $region29: #{tpu_custom_call.1} parent=1 // pred_fallthru
      _
    // Predicated region
    $region30: #{tpu_custom_call.1} parent=1 // pred_check
      _
    $region31: #{tpu_custom_call.1} parent=1 // pred_check_branch
      %73 = sbr.rel (0) target = $region33
    $region32: #{tpu_custom_call.1} parent=1 // pred_region
      _
    $region33: #{tpu_custom_call.1} parent=1 // pred_fallthru
      _
    // Predicated region
    $region34: #{tpu_custom_call.1} parent=1 // pred_check
      _
    $region35: #{tpu_custom_call.1} parent=1 // pred_check_branch
      %75 = sbr.rel (0) target = $region37
    $region36: #{tpu_custom_call.1} parent=1 // pred_region
      _
    $region37: #{tpu_custom_call.1} parent=1 // pred_fallthru
      _
    // Predicated region
    $region38: #{tpu_custom_call.1} parent=1 // pred_check
      _
    $region39: #{tpu_custom_call.1} parent=1 // pred_check_branch
      %77 = sbr.rel (0) target = $region41
    $region40: #{tpu_custom_call.1} parent=1 // pred_region
      %79 = dma.done [#allocation3], 32
    $region41: #{tpu_custom_call.1} parent=1 // pred_fallthru
      _
    // Predicated region
    $region42: #{tpu_custom_call.1} parent=1 // pred_check
      _
    $region43: #{tpu_custom_call.1} parent=1 // pred_check_branch
      %81 = sbr.rel (0) target = $region45
    $region44: #{tpu_custom_call.1} parent=1 // pred_region
      %83 = dma.done [#allocation6], 384
    $region45: #{tpu_custom_call.1} parent=1 // pred_fallthru
      _
    // Predicated region
    $region46: #{tpu_custom_call.1} parent=1 // pred_check
      _
    $region47: #{tpu_custom_call.1} parent=1 // pred_check_branch
      %85 = sbr.rel (0) target = $region49
    $region48: #{tpu_custom_call.1} parent=1 // pred_region
      %87 = dma.done [#allocation6], 128
    $region49: #{tpu_custom_call.1} parent=1 // pred_fallthru
      _
    // Predicated region
    $region50: #{tpu_custom_call.1} parent=1 // pred_check
      _
    $region51: #{tpu_custom_call.1} parent=1 // pred_check_branch
      %89 = sbr.rel (0) target = $region53
    $region52: #{tpu_custom_call.1} parent=1 // pred_region
      %91 = dma.done [#allocation9], 1024
    $region53: #{tpu_custom_call.1} parent=1 // pred_fallthru
      _
    %v92 = vld [vmem:[%s0] sm:$0x3]
    %v93 = vld [vmem:[#allocation5] sm:$0xff]
    %v94 = vld [vmem:[#allocation5 + $0x8] sm:$0xff]
    %v95 = vld [vmem:[#allocation5 + $0x10] sm:$0xff]
    %v96 = vld [vmem:[#allocation2] sm:$0x3]
    %v97 = vld [vmem:[#allocation7] sm:$0xff]
    %vm98 = vcmask 64512
    %v100 = vsel %vm98, %v96, 0
    %102 = vmatpush.msra.mxu0 0.0
    %103 = vmatpush.msra.mxu0 0.0
    %104 = vmatpush.msra.mxu0 0.0
    %105 = vmatpush.msra.mxu0 0.0
    %106 = vmatpush.msra.mxu0 0.0
    %107 = vmatpush.msra.mxu0 0.0
    %108 = vmatpush.msra.mxu0 0.0
    %109 = vmatpush.msra.mxu0 0.0
    %110 = vmatpush.msra.mxu0 0.0
    %111 = vmatpush.msra.mxu0 0.0
    %112 = vmatpush.msra.mxu0 0.0
    %113 = vmatpush.msra.mxu0 0.0
    %114 = vmatpush.msra.mxu0 0.0
    %115 = vmatpush.msra.mxu0 0.0
    %116 = vmatpush.msra.mxu0 0.0
    %117 = vmatpush.msra.mxu0 %v97
    %118 = vmatmul.f32.gmra.mxu0 %v100
    %v119 = vpop.f32.mrf.mxu0
    %v120 = vadd.f32 0.0, %v119
    %121 = vdwg.mxu0
    %vm122 = vcmask 195584
    %v124 = vsel %vm122, %v92, 0
    %126 = vmatpush.msra.mxu0 0.0
    %127 = vmatpush.msra.mxu0 0.0
    %128 = vmatpush.msra.mxu0 0.0
    %129 = vmatpush.msra.mxu0 0.0
    %130 = vmatpush.msra.mxu0 0.0
    %131 = vmatpush.msra.mxu0 0.0
    %132 = vmatpush.msra.mxu0 0.0
    %133 = vmatpush.msra.mxu0 0.0
    %134 = vmatpush.msra.mxu0 0.0
    %135 = vmatpush.msra.mxu0 0.0
    %136 = vmatpush.msra.mxu0 0.0
    %137 = vmatpush.msra.mxu0 0.0
    %138 = vmatpush.msra.mxu0 0.0
    %139 = vmatpush.msra.mxu0 %v95
    %140 = vmatpush.msra.mxu0 %v94
    %141 = vmatpush.msra.mxu0 %v93
    %142 = vmatmul.f32.gmra.mxu0 %v124
    %v143 = vpop.f32.mrf.mxu0
    %v144 = vadd.f32 %v120, %v143
    %145 = vdwg.mxu0
    %v146 = vld [vmem:[%s4] sm:$0x1]
    %v148 = vperm.slane %v146, 0
    %v150 = vadd.f32 %v144, %v148
    %v151 = vmax.f32 %v150, 0.0
    %v152 = vld [vmem:[#allocation8] sm:$0xff]
    %v153 = vld [vmem:[#allocation8 + $0x8] sm:$0xff]
    %v154 = vld [vmem:[#allocation8 + $0x10] sm:$0xff]
    %v155 = vld [vmem:[#allocation8 + $0x18] sm:$0xff]
    %v156 = vld [vmem:[#allocation8 + $0x20] sm:$0xff]
    %v157 = vld [vmem:[#allocation8 + $0x28] sm:$0xff]
    %v158 = vld [vmem:[#allocation8 + $0x30] sm:$0xff]
    %v159 = vld [vmem:[#allocation8 + $0x38] sm:$0xff]
    %v160 = vld [vmem:[%s6] sm:$0x1]
    %v162 = vperm.slane %v160, 0
    %vm164 = vcmask 523264
    %v166 = vsel %vm164, %v151, 0
    %168 = vmatpush.msra.mxu0 0.0
    %169 = vmatpush.msra.mxu0 0.0
    %170 = vmatpush.msra.mxu0 0.0
    %171 = vmatpush.msra.mxu0 0.0
    %172 = vmatpush.msra.mxu0 0.0
    %173 = vmatpush.msra.mxu0 0.0
    %174 = vmatpush.msra.mxu0 0.0
    %175 = vmatpush.msra.mxu0 0.0
    %176 = vmatpush.msra.mxu0 %v159
    %177 = vmatpush.msra.mxu0 %v158
    %178 = vmatpush.msra.mxu0 %v157
    %179 = vmatpush.msra.mxu0 %v156
    %180 = vmatpush.msra.mxu0 %v155
    %181 = vmatpush.msra.mxu0 %v154
    %182 = vmatpush.msra.mxu0 %v153
    %183 = vmatpush.msra.mxu0 %v152
    %184 = vmatmul.f32.gmra.mxu0 %v166
    %v185 = vpop.f32.mrf.mxu0
    %v186 = vadd.f32 %v162, %v185
    %187 = vdwg.mxu0
    %v188 = vmax.f32 %v186, 0.0
    %v189 = vld [vmem:[%s7] sm:$0x3]
    %v190 = vld [vmem:[%s8] sm:$0x3]
    %192 = vset.pattern.permute.xlu0 0
    %193 = vperm.xlu0 %192, %v190
    %v194 = vpop.permute.xlu0 %193
    %v197 = vsel %vm164, %v189, 0
    %v200 = vsel %vm164, %v188, 0
    %202 = vmatpush.xpose.msra.mxu0 0.0
    %203 = vmatpush.xpose.msra.mxu0 0.0
    %204 = vmatpush.xpose.msra.mxu0 0.0
    %205 = vmatpush.xpose.msra.mxu0 0.0
    %206 = vmatpush.xpose.msra.mxu0 0.0
    %207 = vmatpush.xpose.msra.mxu0 0.0
    %208 = vmatpush.xpose.msra.mxu0 0.0
    %209 = vmatpush.xpose.msra.mxu0 0.0
    %210 = vmatpush.xpose.msra.mxu0 0.0
    %211 = vmatpush.xpose.msra.mxu0 0.0
    %212 = vmatpush.xpose.msra.mxu0 0.0
    %213 = vmatpush.xpose.msra.mxu0 0.0
    %214 = vmatpush.xpose.msra.mxu0 0.0
    %215 = vmatpush.xpose.msra.mxu0 0.0
    %216 = vmatpush.xpose.msra.mxu0 0.0
    %217 = vmatpush.xpose.msra.mxu0 %v200
    %218 = vmatmul.f32.gmra.mxu0 %v197
    %v219 = vpop.f32.mrf.mxu0
    %v220 = vadd.f32 %v194, %v219
    %221 = vdwg.mxu0
    %vm222 = vcmask 9216
    %v223 = vsel %vm222, %v220, inf
    %v224 = vrot.slane %v223, 4
    %v225 = vmin.f32 %v223, %v224
    %v226 = vrot.slane %v225, 2
    %v227 = vmin.f32 %v225, %v226
    %v228 = vrot.slane %v227, 1
    %v229 = vmin.f32 %v227, %v228
    %vm230 = vcmask 8192
    %231 = vst.msk [vmem:[#allocation10] sm:$0x1] %vm230, %v229
    // Predicated region
    $region54: #{tpu_custom_call.1} parent=1 // pred_check
      _
    $region55: #{tpu_custom_call.1} parent=1 // pred_check_branch
      %233 = sbr.rel (0) target = $region57
    $region56: #{tpu_custom_call.1} parent=1 // pred_region
      %235 = vsyncadd [#allocation4], 0
      %s237 = sshll.u32 [#allocation10], 4
      %s238 = int_to_ptr.vmem [resolvable:$true] %s237
      %s239 = sshll.u32 %s9, 4
      %s240 = int_to_ptr.hbm [resolvable:$true] %s239
      %242 = dma.vmem_to_hbm [thread:$0]  %s238, 16, %s240, [#allocation4]
    $region57: #{tpu_custom_call.1} parent=1 // pred_fallthru
      _
    // Predicated region
    $region58: #{tpu_custom_call.1} parent=1 // pred_check
      _
    $region59: #{tpu_custom_call.1} parent=1 // pred_check_branch
      %244 = sbr.rel (0) target = $region61
    $region60: #{tpu_custom_call.1} parent=1 // pred_region
      %246 = dma.done [#allocation4], 16
    $region61: #{tpu_custom_call.1} parent=1 // pred_fallthru
      _
    %247 = vsyncpa [#allocation3], 1
    %248 = vsyncpa [#allocation6], 1
    %249 = vsyncpa [#allocation9], 1
    %250 = vsyncpa [#allocation4], 1

</llo_original>
